<compile_context>
chip_gen: v5e
topology: v5e:2x2
jax: 0.10.0
libtpu: 0.0.40
codegen_flags: <defaults>
</compile_context>

<pallas_src>
import numpy as np
import jax
import jax.numpy as jnp
from jax.experimental import pallas as pl
from jax.experimental.pallas import tpu as pltpu
from jax.scipy.special import digamma as jsp_digamma, gammaln as jsp_gammaln

L = 7                       # tree depth
N_NODES = 2 ** L - 1        # 127 internal nodes
N_PAD = 128                 # nodes padded to lane width
M_LEAVES = 2 ** L           # 128 leaves
PRIOR_C = 1.0

_HALF_LOG_2PI = float(0.5 * np.log(2.0 * np.pi))


# ----------------------------- in-kernel special functions -----------------
def _digamma_lgamma(x):
    """Fused digamma(x) and lgamma(x) for x > 0 on a packed (rows,128) block.

    8-step recurrence + asymptotic / Stirling series (float32 accurate).
    z, 1/z, 1/z^2 and log(z) are shared between the two series, so the packed
    block pays for the transcendental (EUP) work exactly once.
    """
    s_dg = jnp.zeros_like(x)
    s_lg = jnp.zeros_like(x)
    for k in range(8):
        t = x + float(k)
        s_dg = s_dg + 1.0 / t          # exact divide: keeps recurrence accurate
        s_lg = s_lg + jnp.log(t)
    z = x + 8.0
    inv = pl.reciprocal(z, approx=True)   # only feeds small correction terms
    inv2 = inv * inv
    lz = jnp.log(z)
    dg = (lz - 0.5 * inv
          - inv2 * (1.0 / 12.0 - inv2 * (1.0 / 120.0 - inv2 * (1.0 / 252.0)))
          - s_dg)
    lg = ((z - 0.5) * lz - z + _HALF_LOG_2PI
          + inv * (1.0 / 12.0 - inv2 * (1.0 / 360.0 - inv2 * (1.0 / 1260.0)))
          - s_lg)
    return dg, lg


# ----------------------------- Pallas kernel --------------------------------
def polya_tree_kernel(params_ref, bounds_ref, out_ref):
    # params rows: 0=alpha 1=beta 2=alpha+beta 3=a0 4=b0 5=mask (6,7 unused =1)
    a = params_ref[0:1, :]
    b = params_ref[1:2, :]
    a0 = params_ref[3:4, :]
    b0 = params_ref[4:5, :]
    mask = params_ref[5:6, :]
    ab = a + b                               # VALU; avoids an extra load

    # One packed special-function pass over [alpha; beta; alpha+beta].
    x = params_ref[0:3, :]                   # (3, 128)
    dg, lg = _digamma_lgamma(x)
    dg_a, dg_b, dg_ab = dg[0:1, :], dg[1:2, :], dg[2:3, :]
    lg_a, lg_b, lg_ab = lg[0:1, :], lg[1:2, :], lg[2:3, :]

    # forward(): expected leaf log-probabilities.
    elog_l = (dg_a - dg_ab) * mask           # E_q[log theta_n]
    elog_r = (dg_b - dg_ab) * mask           # E_q[log (1 - theta_n)]
    elog = jnp.concatenate([elog_l, elog_r], axis=-1)          # (1, 256)

    # Path-indicator matrix generated in-kernel (no 128 KB constant DMA):
    # row r is 1 for leaves in [lb_r, ub_r); rows 0..127 = "go left" edges,
    # rows 128..255 = "go right" edges, padding rows have lb == ub == 0.
    leaf_idx = jax.lax.broadcasted_iota(
        jnp.int32, (2 * N_PAD, M_LEAVES), 1).astype(jnp.float32)
    lb = bounds_ref[:, 0:1]
    ub = bounds_ref[:, 1:2]
    paths = jnp.where((leaf_idx >= lb) & (leaf_idx < ub), 1.0, 0.0)

    # Single fused MXU matmul: (1,256) @ (256,128) -> (1,128) leaf log-probs.
    leaf = jnp.dot(elog, paths, preferred_element_type=jnp.float32)

    # kl(): variational part of sum_n KL(Beta(a,b) || Beta(a0,b0)).
    # Prior-only lgamma terms are constants and are added outside the kernel.
    kl_node = (lg_ab - lg_a - lg_b
               + (a - a0) * dg_a + (b - b0) * dg_b
               + (a0 + b0 - ab) * dg_ab)
    kl = jnp.sum(kl_node * mask, axis=-1, keepdims=True)       # (1, 1)

    # Single lane-dense output: lanes 0..127 = leaf log-probs, lane 128 = KL.
    out_ref[...] = jnp.concatenate(
        [leaf, jnp.broadcast_to(kl, (1, M_LEAVES))], axis=-1)


@jax.jit
def optional_polya_tree(alpha, beta, a0, b0, mask, bounds, prior_kl_const):
    # Merge the five (1,128) parameter vectors into one (8,128) VMEM block.
    params = jnp.concatenate(
        [alpha, beta, alpha + beta, a0, b0, mask,
         jnp.ones((2, N_PAD), jnp.float32)], axis=0)
    out = pl.pallas_call(
        polya_tree_kernel,
        out_shape=jax.ShapeDtypeStruct((1, 2 * M_LEAVES), jnp.float32),
        in_specs=[pl.BlockSpec(memory_space=pltpu.MemorySpace.VMEM),
                  pl.BlockSpec(memory_space=pltpu.MemorySpace.VMEM)],
        out_specs=pl.BlockSpec(memory_space=pltpu.MemorySpace.VMEM),
    )(params, bounds)
    leaf = out[0, :M_LEAVES]
    kl = out[0, M_LEAVES] + prior_kl_const   # hoisted prior lgamma constant
    return leaf, kl


# ----------------------------- plain-JAX glue --------------------------------
def build_bounds(depth):
    """Per-row [lb, ub) leaf-index bounds of the concatenated [plt; prt] matrix."""
    bounds = np.zeros((2 * N_PAD, 8), np.float32)
    for lvl in range(1, depth + 1):
        half = 2 ** (depth - lvl)
        for prefix in range(2 ** (lvl - 1)):
            node = (2 ** (lvl - 1) - 1) + prefix
            lo = prefix * 2 * half
            bounds[node, 0] = lo                      # left edge: [lo, lo+half)
            bounds[node, 1] = lo + half
            bounds[N_PAD + node, 0] = lo + half       # right edge: [lo+half, lo+2*half)
            bounds[N_PAD + node, 1] = lo + 2 * half
    return jnp.asarray(bounds)


def build_path_matrices(depth):
    """Reference-only: plt[node, leaf]=1 if path goes LEFT at node; prt for RIGHT."""
    m = 2 ** depth
    plt = np.zeros((N_PAD, m), np.float32)
    prt = np.zeros((N_PAD, m), np.float32)
    for leaf in range(m):
        for lvl in range(1, depth + 1):
            prefix = leaf >> (depth - lvl + 1)
            node = (2 ** (lvl - 1) - 1) + prefix
            bit = (leaf >> (depth - lvl)) & 1
            if bit == 0:
                plt[node, leaf] = 1.0
            else:
                prt[node, leaf] = 1.0
    return jnp.asarray(plt), jnp.asarray(prt)


def init_params(key):
    k1, k2 = jax.random.split(key)
    alpha_n = jax.random.uniform(k1, (N_NODES,), jnp.float32, 0.5, 2.0)
    beta_n = jax.random.uniform(k2, (N_NODES,), jnp.float32, 0.5, 2.0)
    levels = np.concatenate(
        [np.full(2 ** (l - 1), l, np.float32) for l in range(1, L + 1)])
    prior_n = (PRIOR_C * levels ** 2).astype(np.float32)

    def pad(v, fill):
        out = np.full((1, N_PAD), fill, np.float32)
        out[0, :N_NODES] = np.asarray(v)
        return jnp.asarray(out)

    alpha = pad(alpha_n, 1.0)
    beta = pad(beta_n, 1.0)
    a0 = pad(prior_n, 1.0)
    b0 = pad(prior_n, 1.0)
    mask = pad(np.ones(N_NODES, np.float32), 0.0)
    return alpha, beta, a0, b0, mask


def reference(alpha, beta, a0, b0, mask, plt, prt):
    dg_a, dg_b = jsp_digamma(alpha), jsp_digamma(beta)
    dg_ab = jsp_digamma(alpha + beta)
    elog_l = (dg_a - dg_ab) * mask
    elog_r = (dg_b - dg_ab) * mask
    leaf = elog_l @ plt + elog_r @ prt
    kl_node = (jsp_gammaln(alpha + beta) - jsp_gammaln(alpha) - jsp_gammaln(beta)
               - jsp_gammaln(a0 + b0) + jsp_gammaln(a0) + jsp_gammaln(b0)
               + (alpha - a0) * dg_a + (beta - b0) * dg_b
               + (a0 + b0 - alpha - beta) * dg_ab)
    return leaf[0], jnp.sum(kl_node * mask)


if __name__ == "__main__":
    # TODO(synk): the reference module's forward()/kl() bodies are empty (`pass`);
    # semantics here follow the standard variational Polya-tree construction.
    key = jax.random.PRNGKey(0)
    alpha, beta, a0, b0, mask = init_params(key)
    bounds = build_bounds(L)

    # Prior-only KL terms: lgamma(a0)+lgamma(b0)-lgamma(a0+b0) is constant per
    # node (a0 = b0 = c * l^2) -> hoisted out of the kernel entirely.
    prior_kl_const = jnp.sum(
        mask * (jsp_gammaln(a0) + jsp_gammaln(b0) - jsp_gammaln(a0 + b0)))

    leaf_logp, kl = optional_polya_tree(
        alpha, beta, a0, b0, mask, bounds, prior_kl_const)
    jax.block_until_ready((leaf_logp, kl))

    plt_m, prt_m = build_path_matrices(L)
    ref_leaf, ref_kl = reference(alpha, beta, a0, b0, mask, plt_m, prt_m)
    assert np.allclose(np.asarray(leaf_logp), np.asarray(ref_leaf),
                       rtol=1e-3, atol=1e-3)
    assert np.allclose(float(kl), float(ref_kl), rtol=1e-3, atol=1e-3)
    print("KERNEL_OK")
</pallas_src>

<mosaic_0001>
module attributes {stable_mosaic.version = 11 : i64} {
  func.func @polya_tree_kernel(%arg0: memref<8x128xf32, #tpu.memory_space<vmem>>, %arg1: memref<256x8xf32, #tpu.memory_space<vmem>>, %arg2: memref<1x256xf32, #tpu.memory_space<vmem>>) attributes {dimension_semantics = [], scalar_prefetch = 0 : i64, scratch_operands = 0 : i64, tpu.core_type = #tpu.core_type<tc>} {
    %c0 = arith.constant 0 : index
    %c0_0 = arith.constant 0 : index
    %0 = vector.load %arg0[%c0, %c0_0] : memref<8x128xf32, #tpu.memory_space<vmem>>, vector<1x128xf32>
    %c1 = arith.constant 1 : index
    %c0_1 = arith.constant 0 : index
    %1 = vector.load %arg0[%c1, %c0_1] : memref<8x128xf32, #tpu.memory_space<vmem>>, vector<1x128xf32>
    %c3 = arith.constant 3 : index
    %c0_2 = arith.constant 0 : index
    %2 = vector.load %arg0[%c3, %c0_2] : memref<8x128xf32, #tpu.memory_space<vmem>>, vector<1x128xf32>
    %c4 = arith.constant 4 : index
    %c0_3 = arith.constant 0 : index
    %3 = vector.load %arg0[%c4, %c0_3] : memref<8x128xf32, #tpu.memory_space<vmem>>, vector<1x128xf32>
    %c5 = arith.constant 5 : index
    %c0_4 = arith.constant 0 : index
    %4 = vector.load %arg0[%c5, %c0_4] : memref<8x128xf32, #tpu.memory_space<vmem>>, vector<1x128xf32>
    %5 = arith.addf %0, %1 : vector<1x128xf32>
    %c0_5 = arith.constant 0 : index
    %c0_6 = arith.constant 0 : index
    %6 = vector.load %arg0[%c0_5, %c0_6] : memref<8x128xf32, #tpu.memory_space<vmem>>, vector<3x128xf32>
    %cst = arith.constant 0.000000e+00 : f32
    %7 = vector.broadcast %cst : f32 to vector<3x128xf32>
    %cst_7 = arith.constant 0.000000e+00 : f32
    %8 = vector.broadcast %cst_7 : f32 to vector<3x128xf32>
    %cst_8 = arith.constant 0.000000e+00 : f32
    %9 = vector.broadcast %cst_8 : f32 to vector<3x128xf32>
    %10 = arith.addf %6, %9 : vector<3x128xf32>
    %cst_9 = arith.constant 1.000000e+00 : f32
    %11 = vector.broadcast %cst_9 : f32 to vector<3x128xf32>
    %12 = arith.divf %11, %10 : vector<3x128xf32>
    %13 = arith.addf %7, %12 : vector<3x128xf32>
    %14 = math.log %10 : vector<3x128xf32>
    %15 = arith.addf %8, %14 : vector<3x128xf32>
    %cst_10 = arith.constant 1.000000e+00 : f32
    %16 = vector.broadcast %cst_10 : f32 to vector<3x128xf32>
    %17 = arith.addf %6, %16 : vector<3x128xf32>
    %cst_11 = arith.constant 1.000000e+00 : f32
    %18 = vector.broadcast %cst_11 : f32 to vector<3x128xf32>
    %19 = arith.divf %18, %17 : vector<3x128xf32>
    %20 = arith.addf %13, %19 : vector<3x128xf32>
    %21 = math.log %17 : vector<3x128xf32>
    %22 = arith.addf %15, %21 : vector<3x128xf32>
    %cst_12 = arith.constant 2.000000e+00 : f32
    %23 = vector.broadcast %cst_12 : f32 to vector<3x128xf32>
    %24 = arith.addf %6, %23 : vector<3x128xf32>
    %cst_13 = arith.constant 1.000000e+00 : f32
    %25 = vector.broadcast %cst_13 : f32 to vector<3x128xf32>
    %26 = arith.divf %25, %24 : vector<3x128xf32>
    %27 = arith.addf %20, %26 : vector<3x128xf32>
    %28 = math.log %24 : vector<3x128xf32>
    %29 = arith.addf %22, %28 : vector<3x128xf32>
    %cst_14 = arith.constant 3.000000e+00 : f32
    %30 = vector.broadcast %cst_14 : f32 to vector<3x128xf32>
    %31 = arith.addf %6, %30 : vector<3x128xf32>
    %cst_15 = arith.constant 1.000000e+00 : f32
    %32 = vector.broadcast %cst_15 : f32 to vector<3x128xf32>
    %33 = arith.divf %32, %31 : vector<3x128xf32>
    %34 = arith.addf %27, %33 : vector<3x128xf32>
    %35 = math.log %31 : vector<3x128xf32>
    %36 = arith.addf %29, %35 : vector<3x128xf32>
    %cst_16 = arith.constant 4.000000e+00 : f32
    %37 = vector.broadcast %cst_16 : f32 to vector<3x128xf32>
    %38 = arith.addf %6, %37 : vector<3x128xf32>
    %cst_17 = arith.constant 1.000000e+00 : f32
    %39 = vector.broadcast %cst_17 : f32 to vector<3x128xf32>
    %40 = arith.divf %39, %38 : vector<3x128xf32>
    %41 = arith.addf %34, %40 : vector<3x128xf32>
    %42 = math.log %38 : vector<3x128xf32>
    %43 = arith.addf %36, %42 : vector<3x128xf32>
    %cst_18 = arith.constant 5.000000e+00 : f32
    %44 = vector.broadcast %cst_18 : f32 to vector<3x128xf32>
    %45 = arith.addf %6, %44 : vector<3x128xf32>
    %cst_19 = arith.constant 1.000000e+00 : f32
    %46 = vector.broadcast %cst_19 : f32 to vector<3x128xf32>
    %47 = arith.divf %46, %45 : vector<3x128xf32>
    %48 = arith.addf %41, %47 : vector<3x128xf32>
    %49 = math.log %45 : vector<3x128xf32>
    %50 = arith.addf %43, %49 : vector<3x128xf32>
    %cst_20 = arith.constant 6.000000e+00 : f32
    %51 = vector.broadcast %cst_20 : f32 to vector<3x128xf32>
    %52 = arith.addf %6, %51 : vector<3x128xf32>
    %cst_21 = arith.constant 1.000000e+00 : f32
    %53 = vector.broadcast %cst_21 : f32 to vector<3x128xf32>
    %54 = arith.divf %53, %52 : vector<3x128xf32>
    %55 = arith.addf %48, %54 : vector<3x128xf32>
    %56 = math.log %52 : vector<3x128xf32>
    %57 = arith.addf %50, %56 : vector<3x128xf32>
    %cst_22 = arith.constant 7.000000e+00 : f32
    %58 = vector.broadcast %cst_22 : f32 to vector<3x128xf32>
    %59 = arith.addf %6, %58 : vector<3x128xf32>
    %cst_23 = arith.constant 1.000000e+00 : f32
    %60 = vector.broadcast %cst_23 : f32 to vector<3x128xf32>
    %61 = arith.divf %60, %59 : vector<3x128xf32>
    %62 = arith.addf %55, %61 : vector<3x128xf32>
    %63 = math.log %59 : vector<3x128xf32>
    %64 = arith.addf %57, %63 : vector<3x128xf32>
    %cst_24 = arith.constant 8.000000e+00 : f32
    %65 = vector.broadcast %cst_24 : f32 to vector<3x128xf32>
    %66 = arith.addf %6, %65 : vector<3x128xf32>
    %67 = tpu.reciprocal %66 {approx = true} : vector<3x128xf32> -> vector<3x128xf32>
    %68 = arith.mulf %67, %67 : vector<3x128xf32>
    %69 = math.log %66 : vector<3x128xf32>
    %cst_25 = arith.constant 5.000000e-01 : f32
    %70 = vector.broadcast %cst_25 : f32 to vector<3x128xf32>
    %71 = arith.mulf %70, %67 : vector<3x128xf32>
    %72 = arith.subf %69, %71 : vector<3x128xf32>
    %cst_26 = arith.constant 0.0039682542 : f32
    %73 = vector.broadcast %cst_26 : f32 to vector<3x128xf32>
    %74 = arith.mulf %68, %73 : vector<3x128xf32>
    %cst_27 = arith.constant 0.00833333377 : f32
    %75 = vector.broadcast %cst_27 : f32 to vector<3x128xf32>
    %76 = arith.subf %75, %74 : vector<3x128xf32>
    %77 = arith.mulf %68, %76 : vector<3x128xf32>
    %cst_28 = arith.constant 0.0833333358 : f32
    %78 = vector.broadcast %cst_28 : f32 to vector<3x128xf32>
    %79 = arith.subf %78, %77 : vector<3x128xf32>
    %80 = arith.mulf %68, %79 : vector<3x128xf32>
    %81 = arith.subf %72, %80 : vector<3x128xf32>
    %82 = arith.subf %81, %62 : vector<3x128xf32>
    %cst_29 = arith.constant 5.000000e-01 : f32
    %83 = vector.broadcast %cst_29 : f32 to vector<3x128xf32>
    %84 = arith.subf %66, %83 : vector<3x128xf32>
    %85 = arith.mulf %84, %69 : vector<3x128xf32>
    %86 = arith.subf %85, %66 : vector<3x128xf32>
    %cst_30 = arith.constant 0.918938517 : f32
    %87 = vector.broadcast %cst_30 : f32 to vector<3x128xf32>
    %88 = arith.addf %86, %87 : vector<3x128xf32>
    %cst_31 = arith.constant 7.93650805E-4 : f32
    %89 = vector.broadcast %cst_31 : f32 to vector<3x128xf32>
    %90 = arith.mulf %68, %89 : vector<3x128xf32>
    %cst_32 = arith.constant 0.00277777785 : f32
    %91 = vector.broadcast %cst_32 : f32 to vector<3x128xf32>
    %92 = arith.subf %91, %90 : vector<3x128xf32>
    %93 = arith.mulf %68, %92 : vector<3x128xf32>
    %cst_33 = arith.constant 0.0833333358 : f32
    %94 = vector.broadcast %cst_33 : f32 to vector<3x128xf32>
    %95 = arith.subf %94, %93 : vector<3x128xf32>
    %96 = arith.mulf %67, %95 : vector<3x128xf32>
    %97 = arith.addf %88, %96 : vector<3x128xf32>
    %98 = arith.subf %97, %64 : vector<3x128xf32>
    %99 = vector.extract_strided_slice %82 {offsets = [0, 0], sizes = [1, 128], strides = [1, 1]} : vector<3x128xf32> to vector<1x128xf32>
    %100 = vector.extract_strided_slice %82 {offsets = [1, 0], sizes = [1, 128], strides = [1, 1]} : vector<3x128xf32> to vector<1x128xf32>
    %101 = vector.extract_strided_slice %82 {offsets = [2, 0], sizes = [1, 128], strides = [1, 1]} : vector<3x128xf32> to vector<1x128xf32>
    %102 = vector.extract_strided_slice %98 {offsets = [0, 0], sizes = [1, 128], strides = [1, 1]} : vector<3x128xf32> to vector<1x128xf32>
    %103 = vector.extract_strided_slice %98 {offsets = [1, 0], sizes = [1, 128], strides = [1, 1]} : vector<3x128xf32> to vector<1x128xf32>
    %104 = vector.extract_strided_slice %98 {offsets = [2, 0], sizes = [1, 128], strides = [1, 1]} : vector<3x128xf32> to vector<1x128xf32>
    %105 = arith.subf %99, %101 : vector<1x128xf32>
    %106 = arith.mulf %105, %4 : vector<1x128xf32>
    %107 = arith.subf %100, %101 : vector<1x128xf32>
    %108 = arith.mulf %107, %4 : vector<1x128xf32>
    %109 = tpu.concatenate %106, %108 in 1 : vector<1x128xf32>, vector<1x128xf32> -> vector<1x256xf32>
    %110 = tpu.iota {dimensions = array<i32: 1>} : vector<256x128xi32>
    %111 = arith.sitofp %110 : vector<256x128xi32> to vector<256x128xf32>
    %c0_34 = arith.constant 0 : index
    %c0_35 = arith.constant 0 : index
    %112 = vector.load %arg1[%c0_34, %c0_35] : memref<256x8xf32, #tpu.memory_space<vmem>>, vector<256x1xf32>
    %c0_36 = arith.constant 0 : index
    %c1_37 = arith.constant 1 : index
    %113 = vector.load %arg1[%c0_36, %c1_37] : memref<256x8xf32, #tpu.memory_space<vmem>>, vector<256x1xf32>
    %114 = vector.broadcast %112 : vector<256x1xf32> to vector<256x128xf32>
    %115 = arith.cmpf oge, %111, %114 : vector<256x128xf32>
    %116 = vector.broadcast %113 : vector<256x1xf32> to vector<256x128xf32>
    %117 = arith.cmpf olt, %111, %116 : vector<256x128xf32>
    %118 = arith.andi %115, %117 : vector<256x128xi1>
    %cst_38 = arith.constant 1.000000e+00 : f32
    %cst_39 = arith.constant 0.000000e+00 : f32
    %119 = vector.broadcast %cst_38 : f32 to vector<256x128xf32>
    %120 = vector.broadcast %cst_39 : f32 to vector<256x128xf32>
    %121 = arith.select %118, %119, %120 : vector<256x128xi1>, vector<256x128xf32>
    %cst_40 = arith.constant dense<0.000000e+00> : vector<1x128xf32>
    %122 = tpu.matmul %109, %121, %cst_40 {dimension_numbers = #tpu.dot_dimension_numbers<[1], [0], [0], [1], [0, 0, 1, 1], [], []>} : vector<1x256xf32>, vector<256x128xf32>, vector<1x128xf32> -> vector<1x128xf32>
    %123 = arith.subf %104, %102 : vector<1x128xf32>
    %124 = arith.subf %123, %103 : vector<1x128xf32>
    %125 = arith.subf %0, %2 : vector<1x128xf32>
    %126 = arith.mulf %125, %99 : vector<1x128xf32>
    %127 = arith.addf %124, %126 : vector<1x128xf32>
    %128 = arith.subf %1, %3 : vector<1x128xf32>
    %129 = arith.mulf %128, %100 : vector<1x128xf32>
    %130 = arith.addf %127, %129 : vector<1x128xf32>
    %131 = arith.addf %2, %3 : vector<1x128xf32>
    %132 = arith.subf %131, %5 : vector<1x128xf32>
    %133 = arith.mulf %132, %101 : vector<1x128xf32>
    %134 = arith.addf %130, %133 : vector<1x128xf32>
    %135 = arith.mulf %134, %4 : vector<1x128xf32>
    %cst_41 = arith.constant dense<0.000000e+00> : vector<1xf32>
    %136 = vector.multi_reduction <add>, %135, %cst_41 [1] : vector<1x128xf32> to vector<1xf32>
    %137 = vector.shape_cast %136 : vector<1xf32> to vector<1x1xf32>
    %138 = vector.shape_cast %137 : vector<1x1xf32> to vector<1x1xf32>
    %139 = vector.broadcast %138 : vector<1x1xf32> to vector<1x128xf32>
    %140 = tpu.concatenate %122, %139 in 1 : vector<1x128xf32>, vector<1x128xf32> -> vector<1x256xf32>
    %c0_42 = arith.constant 0 : index
    %c0_43 = arith.constant 0 : index
    %141 = vector.load %arg2[%c0_42, %c0_43] : memref<1x256xf32, #tpu.memory_space<vmem>>, vector<1x256xf32>
    tpu.vector_store %arg2[%c0_42, %c0_43], %140 {strides = array<i32>} : memref<1x256xf32, #tpu.memory_space<vmem>>, vector<1x256xf32>,
    return
  }
}

</mosaic_0001>

<llo_original>
// kernel: optional_polya_tree.1
$region0: #{optional_polya_tree.1}
  #allocation0 [shape = 'u32[]', space=smem, size = 0x4, offset = 0x4, fixed_abs, tag = 'smem constant byte address 0x4 - core index']
  #allocation1 [shape = 'u32[72,128]{1,0:T(1,128)}', space=vmem, size = 0x9000, scoped, tag = 'internal scratch']
  %s0 = inlined_call_operand.vmem [shape: f32[8,128], index: 0, kind: input, shape index: {}]
  %s1 = inlined_call_operand.vmem [shape: f32[256,8], index: 1, kind: input, shape index: {}]
  %s2 = inlined_call_operand.vmem [shape: f32[1,256], index: 2, kind: output, shape index: {}]
  %s3 = sld [smem:[#allocation0]]
  $region18: #{optional_polya_tree.1} parent=0
    _
  %s5 = ssub.s32 1, %s3
  %s6 = scalar_select 0, %s5, %s3
  // Predicated region
  $region2: #{optional_polya_tree.1} parent=0 // pred_check
    _
  $region3: #{optional_polya_tree.1} parent=0 // pred_check_branch
    %8 = sbr.rel (0) target = $region5
  $region4: #{optional_polya_tree.1} parent=0 // pred_region
    _
  $region5: #{optional_polya_tree.1} parent=0 // pred_fallthru
    _
  // Predicated region
  $region6: #{optional_polya_tree.1} parent=0 // pred_check
    _
  $region7: #{optional_polya_tree.1} parent=0 // pred_check_branch
    %10 = sbr.rel (0) target = $region9
  $region8: #{optional_polya_tree.1} parent=0 // pred_region
    _
  $region9: #{optional_polya_tree.1} parent=0 // pred_fallthru
    _
  %v11 = vld [vmem:[%s0] sm:$0x1]
  %v12 = vld [vmem:[%s0 + $0x1] sm:$0x1]
  %v13 = vld [vmem:[%s0 + $0x3] sm:$0x1]
  %v14 = vld [vmem:[%s0 + $0x4] sm:$0x1]
  %v15 = vld [vmem:[%s0 + $0x5] sm:$0x1]
  %v16 = vadd.f32 %v11, %v12
  %v17 = vld [vmem:[%s0] sm:$0x7]
  %v18 = vadd.f32 %v17, 0.0
  %v19 = vrcp.pop %v18
  %v20 = vmul.f32 %v18, %v19
  %v21 = vsub.f32 1.0, %v20
  %v22 = vmul.f32 %v19, %v21
  %v23 = vadd.f32 %v19, %v22
  %vm24 = vweird.f32 %v18
  %vm25 = vweird.f32 %v19
  %vm26 = vmor %vm24, %vm25
  %v27 = vsel %vm26, %v19, %v23
  %v28 = vand.u32 2147483647, %v18
  %vm29 = vcmp.eq.f32.partialorder %v28, 8.507059e+37
  %v30 = vand.u32 %v18, 2147483648
  %v31 = vor.u32 1.1754944e-38, %v30
  %v32 = vsel %vm29, %v31, %v27
  %v33 = vmul.f32 1.0, %v32
  %v34 = vadd.f32 %v33, 0.0
  %v35 = vlog2.pop %v18
  %v36 = vmul.f32 %v35, 0.6931472
  %v37 = vadd.f32 %v36, 0.0
  %v38 = vadd.f32 %v17, 1.0
  %v39 = vrcp.pop %v38
  %v40 = vmul.f32 %v38, %v39
  %v41 = vsub.f32 1.0, %v40
  %v42 = vmul.f32 %v39, %v41
  %v43 = vadd.f32 %v39, %v42
  %vm44 = vweird.f32 %v38
  %vm45 = vweird.f32 %v39
  %vm46 = vmor %vm44, %vm45
  %v47 = vsel %vm46, %v39, %v43
  %v48 = vand.u32 2147483647, %v38
  %vm49 = vcmp.eq.f32.partialorder %v48, 8.507059e+37
  %v50 = vand.u32 %v38, 2147483648
  %v51 = vor.u32 1.1754944e-38, %v50
  %v52 = vsel %vm49, %v51, %v47
  %v53 = vmul.f32 1.0, %v52
  %v54 = vadd.f32 %v34, %v53
  %v55 = vlog2.pop %v38
  %v56 = vmul.f32 %v55, 0.6931472
  %v57 = vadd.f32 %v37, %v56
  %v58 = vadd.f32 %v17, 2.0
  %v59 = vrcp.pop %v58
  %v60 = vmul.f32 %v58, %v59
  %v61 = vsub.f32 1.0, %v60
  %v62 = vmul.f32 %v59, %v61
  %v63 = vadd.f32 %v59, %v62
  %vm64 = vweird.f32 %v58
  %vm65 = vweird.f32 %v59
  %vm66 = vmor %vm64, %vm65
  %v67 = vsel %vm66, %v59, %v63
  %v68 = vand.u32 2147483647, %v58
  %vm69 = vcmp.eq.f32.partialorder %v68, 8.507059e+37
  %v70 = vand.u32 %v58, 2147483648
  %v71 = vor.u32 1.1754944e-38, %v70
  %v72 = vsel %vm69, %v71, %v67
  %v73 = vmul.f32 1.0, %v72
  %v74 = vadd.f32 %v54, %v73
  %v75 = vlog2.pop %v58
  %v76 = vmul.f32 %v75, 0.6931472
  %v77 = vadd.f32 %v57, %v76
  %v78 = vadd.f32 %v17, 3.0
  %v79 = vrcp.pop %v78
  %v80 = vmul.f32 %v78, %v79
  %v81 = vsub.f32 1.0, %v80
  %v82 = vmul.f32 %v79, %v81
  %v83 = vadd.f32 %v79, %v82
  %vm84 = vweird.f32 %v78
  %vm85 = vweird.f32 %v79
  %vm86 = vmor %vm84, %vm85
  %v87 = vsel %vm86, %v79, %v83
  %v88 = vand.u32 2147483647, %v78
  %vm89 = vcmp.eq.f32.partialorder %v88, 8.507059e+37
  %v90 = vand.u32 %v78, 2147483648
  %v91 = vor.u32 1.1754944e-38, %v90
  %v92 = vsel %vm89, %v91, %v87
  %v93 = vmul.f32 1.0, %v92
  %v94 = vadd.f32 %v74, %v93
  %v95 = vlog2.pop %v78
  %v96 = vmul.f32 %v95, 0.6931472
  %v97 = vadd.f32 %v77, %v96
  %v98 = vadd.f32 %v17, 4.0
  %v99 = vrcp.pop %v98
  %v100 = vmul.f32 %v98, %v99
  %v101 = vsub.f32 1.0, %v100
  %v102 = vmul.f32 %v99, %v101
  %v103 = vadd.f32 %v99, %v102
  %vm104 = vweird.f32 %v98
  %vm105 = vweird.f32 %v99
  %vm106 = vmor %vm104, %vm105
  %v107 = vsel %vm106, %v99, %v103
  %v108 = vand.u32 2147483647, %v98
  %vm109 = vcmp.eq.f32.partialorder %v108, 8.507059e+37
  %v110 = vand.u32 %v98, 2147483648
  %v111 = vor.u32 1.1754944e-38, %v110
  %v112 = vsel %vm109, %v111, %v107
  %v113 = vmul.f32 1.0, %v112
  %v114 = vadd.f32 %v94, %v113
  %v115 = vlog2.pop %v98
  %v116 = vmul.f32 %v115, 0.6931472
  %v117 = vadd.f32 %v97, %v116
  %v118 = vadd.f32 %v17, 5.0
  %v119 = vrcp.pop %v118
  %v120 = vmul.f32 %v118, %v119
  %v121 = vsub.f32 1.0, %v120
  %v122 = vmul.f32 %v119, %v121
  %v123 = vadd.f32 %v119, %v122
  %vm124 = vweird.f32 %v118
  %vm125 = vweird.f32 %v119
  %vm126 = vmor %vm124, %vm125
  %v127 = vsel %vm126, %v119, %v123
  %v128 = vand.u32 2147483647, %v118
  %vm129 = vcmp.eq.f32.partialorder %v128, 8.507059e+37
  %v130 = vand.u32 %v118, 2147483648
  %v131 = vor.u32 1.1754944e-38, %v130
  %v132 = vsel %vm129, %v131, %v127
  %v133 = vmul.f32 1.0, %v132
  %v134 = vadd.f32 %v114, %v133
  %v135 = vlog2.pop %v118
  %v136 = vmul.f32 %v135, 0.6931472
  %v137 = vadd.f32 %v117, %v136
  %v138 = vadd.f32 %v17, 6.0
  %v139 = vrcp.pop %v138
  %v140 = vmul.f32 %v138, %v139
  %v141 = vsub.f32 1.0, %v140
  %v142 = vmul.f32 %v139, %v141
  %v143 = vadd.f32 %v139, %v142
  %vm144 = vweird.f32 %v138
  %vm145 = vweird.f32 %v139
  %vm146 = vmor %vm144, %vm145
  %v147 = vsel %vm146, %v139, %v143
  %v148 = vand.u32 2147483647, %v138
  %vm149 = vcmp.eq.f32.partialorder %v148, 8.507059e+37
  %v150 = vand.u32 %v138, 2147483648
  %v151 = vor.u32 1.1754944e-38, %v150
  %v152 = vsel %vm149, %v151, %v147
  %v153 = vmul.f32 1.0, %v152
  %v154 = vadd.f32 %v134, %v153
  %v155 = vlog2.pop %v138
  %v156 = vmul.f32 %v155, 0.6931472
  %v157 = vadd.f32 %v137, %v156
  %v158 = vadd.f32 %v17, 7.0
  %v159 = vrcp.pop %v158
  %v160 = vmul.f32 %v158, %v159
  %v161 = vsub.f32 1.0, %v160
  %v162 = vmul.f32 %v159, %v161
  %v163 = vadd.f32 %v159, %v162
  %vm164 = vweird.f32 %v158
  %vm165 = vweird.f32 %v159
  %vm166 = vmor %vm164, %vm165
  %v167 = vsel %vm166, %v159, %v163
  %v168 = vand.u32 2147483647, %v158
  %vm169 = vcmp.eq.f32.partialorder %v168, 8.507059e+37
  %v170 = vand.u32 %v158, 2147483648
  %v171 = vor.u32 1.1754944e-38, %v170
  %v172 = vsel %vm169, %v171, %v167
  %v173 = vmul.f32 1.0, %v172
  %v174 = vadd.f32 %v154, %v173
  %v175 = vlog2.pop %v158
  %v176 = vmul.f32 %v175, 0.6931472
  %v177 = vadd.f32 %v157, %v176
  %v178 = vadd.f32 %v17, 8.0
  %v179 = vrcp.pop %v178
  %v180 = vmul.f32 %v179, %v179
  %v181 = vlog2.pop %v178
  %v182 = vmul.f32 %v181, 0.6931472
  %v183 = vmul.f32 %v179, 0.5
  %v184 = vsub.f32 %v182, %v183
  %v185 = vmul.f32 %v180, 0.003968254
  %v186 = vsub.f32 0.008333334, %v185
  %v187 = vmul.f32 %v180, %v186
  %v188 = vsub.f32 0.083333336, %v187
  %v189 = vmul.f32 %v180, %v188
  %v190 = vsub.f32 %v184, %v189
  %v191 = vsub.f32 %v190, %v174
  %v192 = vsub.f32 %v178, 0.5
  %v193 = vmul.f32 %v192, %v182
  %v194 = vsub.f32 %v193, %v178
  %v195 = vadd.f32 %v194, 0.9189385
  %v196 = vmul.f32 %v180, 0.0007936508
  %v197 = vsub.f32 0.0027777778, %v196
  %v198 = vmul.f32 %v180, %v197
  %v199 = vsub.f32 0.083333336, %v198
  %v200 = vmul.f32 %v179, %v199
  %v201 = vadd.f32 %v195, %v200
  %v202 = vsub.f32 %v201, %v177
  %v204 = vrot.slane %v191, 2
  %v206 = vsub.f32 %v191, %v204
  %v207 = vmul.f32 %v206, %v15
  %v208 = vrot.slane %v191, 1
  %v210 = vsub.f32 %v191, %v208
  %v212 = vrot.slane %v15, 7
  %v214 = vmul.f32 %v210, %v212
  %v216 = vrot.slane %v214, 1
  %v218 = vlaneseq
  %v219 = vand.u32 %v218, 127
  %v220 = vcvt.s32.f32 %v219
  %v221 = vld [vmem:[%s1] sm:$0xff]
  %v222 = vld [vmem:[%s1 + $0x8] sm:$0xff]
  %v223 = vld [vmem:[%s1 + $0x10] sm:$0xff]
  %v224 = vld [vmem:[%s1 + $0x18] sm:$0xff]
  %v225 = vld [vmem:[%s1 + $0x20] sm:$0xff]
  %v226 = vld [vmem:[%s1 + $0x28] sm:$0xff]
  %v227 = vld [vmem:[%s1 + $0x30] sm:$0xff]
  %v228 = vld [vmem:[%s1 + $0x38] sm:$0xff]
  %v229 = vld [vmem:[%s1 + $0x40] sm:$0xff]
  %v230 = vld [vmem:[%s1 + $0x48] sm:$0xff]
  %v231 = vld [vmem:[%s1 + $0x50] sm:$0xff]
  %v232 = vld [vmem:[%s1 + $0x58] sm:$0xff]
  %v233 = vld [vmem:[%s1 + $0x60] sm:$0xff]
  %v234 = vld [vmem:[%s1 + $0x68] sm:$0xff]
  %v235 = vld [vmem:[%s1 + $0x70] sm:$0xff]
  %v236 = vld [vmem:[%s1 + $0x78] sm:$0xff]
  %v237 = vld [vmem:[%s1 + $0x80] sm:$0xff]
  %v238 = vld [vmem:[%s1 + $0x88] sm:$0xff]
  %v239 = vld [vmem:[%s1 + $0x90] sm:$0xff]
  %v240 = vld [vmem:[%s1 + $0x98] sm:$0xff]
  %v241 = vld [vmem:[%s1 + $0xa0] sm:$0xff]
  %v242 = vld [vmem:[%s1 + $0xa8] sm:$0xff]
  %v243 = vld [vmem:[%s1 + $0xb0] sm:$0xff]
  %v244 = vld [vmem:[%s1 + $0xb8] sm:$0xff]
  %v245 = vld [vmem:[%s1 + $0xc0] sm:$0xff]
  %v246 = vld [vmem:[%s1 + $0xc8] sm:$0xff]
  %v247 = vld [vmem:[%s1 + $0xd0] sm:$0xff]
  %v248 = vld [vmem:[%s1 + $0xd8] sm:$0xff]
  %v249 = vld [vmem:[%s1 + $0xe0] sm:$0xff]
  %v250 = vld [vmem:[%s1 + $0xe8] sm:$0xff]
  %v251 = vld [vmem:[%s1 + $0xf0] sm:$0xff]
  %v252 = vld [vmem:[%s1 + $0xf8] sm:$0xff]
  %254 = vset.pattern.permute.xlu0 0
  %255 = vperm.xlu0 %254, %v221
  %v256 = vpop.permute.xlu0 %255
  %259 = vset.pattern.permute.xlu0 0
  %260 = vperm.xlu0 %259, %v222
  %v261 = vpop.permute.xlu0 %260
  %264 = vset.pattern.permute.xlu0 0
  %265 = vperm.xlu0 %264, %v223
  %v266 = vpop.permute.xlu0 %265
  %269 = vset.pattern.permute.xlu0 0
  %270 = vperm.xlu0 %269, %v224
  %v271 = vpop.permute.xlu0 %270
  %274 = vset.pattern.permute.xlu0 0
  %275 = vperm.xlu0 %274, %v225
  %v276 = vpop.permute.xlu0 %275
  %279 = vset.pattern.permute.xlu0 0
  %280 = vperm.xlu0 %279, %v226
  %v281 = vpop.permute.xlu0 %280
  %284 = vset.pattern.permute.xlu0 0
  %285 = vperm.xlu0 %284, %v227
  %v286 = vpop.permute.xlu0 %285
  %289 = vset.pattern.permute.xlu0 0
  %290 = vperm.xlu0 %289, %v228
  %v291 = vpop.permute.xlu0 %290
  %294 = vset.pattern.permute.xlu0 0
  %295 = vperm.xlu0 %294, %v229
  %v296 = vpop.permute.xlu0 %295
  %299 = vset.pattern.permute.xlu0 0
  %300 = vperm.xlu0 %299, %v230
  %v301 = vpop.permute.xlu0 %300
  %304 = vset.pattern.permute.xlu0 0
  %305 = vperm.xlu0 %304, %v231
  %v306 = vpop.permute.xlu0 %305
  %309 = vset.pattern.permute.xlu0 0
  %310 = vperm.xlu0 %309, %v232
  %v311 = vpop.permute.xlu0 %310
  %314 = vset.pattern.permute.xlu0 0
  %315 = vperm.xlu0 %314, %v233
  %v316 = vpop.permute.xlu0 %315
  %319 = vset.pattern.permute.xlu0 0
  %320 = vperm.xlu0 %319, %v234
  %v321 = vpop.permute.xlu0 %320
  %324 = vset.pattern.permute.xlu0 0
  %325 = vperm.xlu0 %324, %v235
  %v326 = vpop.permute.xlu0 %325
  %329 = vset.pattern.permute.xlu0 0
  %330 = vperm.xlu0 %329, %v236
  %v331 = vpop.permute.xlu0 %330
  %334 = vset.pattern.permute.xlu0 0
  %335 = vperm.xlu0 %334, %v237
  %v336 = vpop.permute.xlu0 %335
  %339 = vset.pattern.permute.xlu0 0
  %340 = vperm.xlu0 %339, %v238
  %v341 = vpop.permute.xlu0 %340
  %344 = vset.pattern.permute.xlu0 0
  %345 = vperm.xlu0 %344, %v239
  %v346 = vpop.permute.xlu0 %345
  %349 = vset.pattern.permute.xlu0 0
  %350 = vperm.xlu0 %349, %v240
  %v351 = vpop.permute.xlu0 %350
  %354 = vset.pattern.permute.xlu0 0
  %355 = vperm.xlu0 %354, %v241
  %v356 = vpop.permute.xlu0 %355
  %359 = vset.pattern.permute.xlu0 0
  %360 = vperm.xlu0 %359, %v242
  %v361 = vpop.permute.xlu0 %360
  %364 = vset.pattern.permute.xlu0 0
  %365 = vperm.xlu0 %364, %v243
  %v366 = vpop.permute.xlu0 %365
  %369 = vset.pattern.permute.xlu0 0
  %370 = vperm.xlu0 %369, %v244
  %v371 = vpop.permute.xlu0 %370
  %374 = vset.pattern.permute.xlu0 0
  %375 = vperm.xlu0 %374, %v245
  %v376 = vpop.permute.xlu0 %375
  %379 = vset.pattern.permute.xlu0 0
  %380 = vperm.xlu0 %379, %v246
  %v381 = vpop.permute.xlu0 %380
  %384 = vset.pattern.permute.xlu0 0
  %385 = vperm.xlu0 %384, %v247
  %v386 = vpop.permute.xlu0 %385
  %389 = vset.pattern.permute.xlu0 0
  %390 = vperm.xlu0 %389, %v248
  %v391 = vpop.permute.xlu0 %390
  %394 = vset.pattern.permute.xlu0 0
  %395 = vperm.xlu0 %394, %v249
  %v396 = vpop.permute.xlu0 %395
  %399 = vset.pattern.permute.xlu0 0
  %400 = vperm.xlu0 %399, %v250
  %v401 = vpop.permute.xlu0 %400
  %404 = vset.pattern.permute.xlu0 0
  %405 = vperm.xlu0 %404, %v251
  %v406 = vpop.permute.xlu0 %405
  %409 = vset.pattern.permute.xlu0 0
  %410 = vperm.xlu0 %409, %v252
  %v411 = vpop.permute.xlu0 %410
  %vm413 = vcmp.ge.f32.partialorder %v220, %v256
  %vm414 = vcmp.ge.f32.partialorder %v220, %v261
  %vm415 = vcmp.ge.f32.partialorder %v220, %v266
  %vm416 = vcmp.ge.f32.partialorder %v220, %v271
  %vm417 = vcmp.ge.f32.partialorder %v220, %v276
  %vm418 = vcmp.ge.f32.partialorder %v220, %v281
  %vm419 = vcmp.ge.f32.partialorder %v220, %v286
  %vm420 = vcmp.ge.f32.partialorder %v220, %v291
  %vm421 = vcmp.ge.f32.partialorder %v220, %v296
  %vm422 = vcmp.ge.f32.partialorder %v220, %v301
  %vm423 = vcmp.ge.f32.partialorder %v220, %v306
  %vm424 = vcmp.ge.f32.partialorder %v220, %v311
  %vm425 = vcmp.ge.f32.partialorder %v220, %v316
  %vm426 = vcmp.ge.f32.partialorder %v220, %v321
  %vm427 = vcmp.ge.f32.partialorder %v220, %v326
  %vm428 = vcmp.ge.f32.partialorder %v220, %v331
  %vm429 = vcmp.ge.f32.partialorder %v220, %v336
  %vm430 = vcmp.ge.f32.partialorder %v220, %v341
  %vm431 = vcmp.ge.f32.partialorder %v220, %v346
  %vm432 = vcmp.ge.f32.partialorder %v220, %v351
  %vm433 = vcmp.ge.f32.partialorder %v220, %v356
  %vm434 = vcmp.ge.f32.partialorder %v220, %v361
  %vm435 = vcmp.ge.f32.partialorder %v220, %v366
  %vm436 = vcmp.ge.f32.partialorder %v220, %v371
  %vm437 = vcmp.ge.f32.partialorder %v220, %v376
  %vm438 = vcmp.ge.f32.partialorder %v220, %v381
  %vm439 = vcmp.ge.f32.partialorder %v220, %v386
  %vm440 = vcmp.ge.f32.partialorder %v220, %v391
  %vm441 = vcmp.ge.f32.partialorder %v220, %v396
  %vm442 = vcmp.ge.f32.partialorder %v220, %v401
  %vm443 = vcmp.ge.f32.partialorder %v220, %v406
  %vm444 = vcmp.ge.f32.partialorder %v220, %v411
  %445 = vset.pattern.permute.xlu0 1
  %446 = vperm.xlu0 %445, %v221
  %v447 = vpop.permute.xlu0 %446
  %449 = vset.pattern.permute.xlu0 1
  %450 = vperm.xlu0 %449, %v222
  %v451 = vpop.permute.xlu0 %450
  %453 = vset.pattern.permute.xlu0 1
  %454 = vperm.xlu0 %453, %v223
  %v455 = vpop.permute.xlu0 %454
  %457 = vset.pattern.permute.xlu0 1
  %458 = vperm.xlu0 %457, %v224
  %v459 = vpop.permute.xlu0 %458
  %461 = vset.pattern.permute.xlu0 1
  %462 = vperm.xlu0 %461, %v225
  %v463 = vpop.permute.xlu0 %462
  %465 = vset.pattern.permute.xlu0 1
  %466 = vperm.xlu0 %465, %v226
  %v467 = vpop.permute.xlu0 %466
  %469 = vset.pattern.permute.xlu0 1
  %470 = vperm.xlu0 %469, %v227
  %v471 = vpop.permute.xlu0 %470
  %473 = vset.pattern.permute.xlu0 1
  %474 = vperm.xlu0 %473, %v228
  %v475 = vpop.permute.xlu0 %474
  %477 = vset.pattern.permute.xlu0 1
  %478 = vperm.xlu0 %477, %v229
  %v479 = vpop.permute.xlu0 %478
  %481 = vset.pattern.permute.xlu0 1
  %482 = vperm.xlu0 %481, %v230
  %v483 = vpop.permute.xlu0 %482
  %485 = vset.pattern.permute.xlu0 1
  %486 = vperm.xlu0 %485, %v231
  %v487 = vpop.permute.xlu0 %486
  %489 = vset.pattern.permute.xlu0 1
  %490 = vperm.xlu0 %489, %v232
  %v491 = vpop.permute.xlu0 %490
  %493 = vset.pattern.permute.xlu0 1
  %494 = vperm.xlu0 %493, %v233
  %v495 = vpop.permute.xlu0 %494
  %497 = vset.pattern.permute.xlu0 1
  %498 = vperm.xlu0 %497, %v234
  %v499 = vpop.permute.xlu0 %498
  %501 = vset.pattern.permute.xlu0 1
  %502 = vperm.xlu0 %501, %v235
  %v503 = vpop.permute.xlu0 %502
  %505 = vset.pattern.permute.xlu0 1
  %506 = vperm.xlu0 %505, %v236
  %v507 = vpop.permute.xlu0 %506
  %509 = vset.pattern.permute.xlu0 1
  %510 = vperm.xlu0 %509, %v237
  %v511 = vpop.permute.xlu0 %510
  %513 = vset.pattern.permute.xlu0 1
  %514 = vperm.xlu0 %513, %v238
  %v515 = vpop.permute.xlu0 %514
  %517 = vset.pattern.permute.xlu0 1
  %518 = vperm.xlu0 %517, %v239
  %v519 = vpop.permute.xlu0 %518
  %521 = vset.pattern.permute.xlu0 1
  %522 = vperm.xlu0 %521, %v240
  %v523 = vpop.permute.xlu0 %522
  %525 = vset.pattern.permute.xlu0 1
  %526 = vperm.xlu0 %525, %v241
  %v527 = vpop.permute.xlu0 %526
  %529 = vset.pattern.permute.xlu0 1
  %530 = vperm.xlu0 %529, %v242
  %v531 = vpop.permute.xlu0 %530
  %533 = vset.pattern.permute.xlu0 1
  %534 = vperm.xlu0 %533, %v243
  %v535 = vpop.permute.xlu0 %534
  %537 = vset.pattern.permute.xlu0 1
  %538 = vperm.xlu0 %537, %v244
  %v539 = vpop.permute.xlu0 %538
  %541 = vset.pattern.permute.xlu0 1
  %542 = vperm.xlu0 %541, %v245
  %v543 = vpop.permute.xlu0 %542
  %545 = vset.pattern.permute.xlu0 1
  %546 = vperm.xlu0 %545, %v246
  %v547 = vpop.permute.xlu0 %546
  %549 = vset.pattern.permute.xlu0 1
  %550 = vperm.xlu0 %549, %v247
  %v551 = vpop.permute.xlu0 %550
  %553 = vset.pattern.permute.xlu0 1
  %554 = vperm.xlu0 %553, %v248
  %v555 = vpop.permute.xlu0 %554
  %557 = vset.pattern.permute.xlu0 1
  %558 = vperm.xlu0 %557, %v249
  %v559 = vpop.permute.xlu0 %558
  %561 = vset.pattern.permute.xlu0 1
  %562 = vperm.xlu0 %561, %v250
  %v563 = vpop.permute.xlu0 %562
  %565 = vset.pattern.permute.xlu0 1
  %566 = vperm.xlu0 %565, %v251
  %v567 = vpop.permute.xlu0 %566
  %569 = vset.pattern.permute.xlu0 1
  %570 = vperm.xlu0 %569, %v252
  %v571 = vpop.permute.xlu0 %570
  %vm573 = vcmp.lt.f32.partialorder %v220, %v447
  %vm574 = vcmp.lt.f32.partialorder %v220, %v451
  %vm575 = vcmp.lt.f32.partialorder %v220, %v455
  %vm576 = vcmp.lt.f32.partialorder %v220, %v459
  %vm577 = vcmp.lt.f32.partialorder %v220, %v463
  %vm578 = vcmp.lt.f32.partialorder %v220, %v467
  %vm579 = vcmp.lt.f32.partialorder %v220, %v471
  %vm580 = vcmp.lt.f32.partialorder %v220, %v475
  %vm581 = vcmp.lt.f32.partialorder %v220, %v479
  %vm582 = vcmp.lt.f32.partialorder %v220, %v483
  %vm583 = vcmp.lt.f32.partialorder %v220, %v487
  %vm584 = vcmp.lt.f32.partialorder %v220, %v491
  %vm585 = vcmp.lt.f32.partialorder %v220, %v495
  %vm586 = vcmp.lt.f32.partialorder %v220, %v499
  %vm587 = vcmp.lt.f32.partialorder %v220, %v503
  %vm588 = vcmp.lt.f32.partialorder %v220, %v507
  %vm589 = vcmp.lt.f32.partialorder %v220, %v511
  %vm590 = vcmp.lt.f32.partialorder %v220, %v515
  %vm591 = vcmp.lt.f32.partialorder %v220, %v519
  %vm592 = vcmp.lt.f32.partialorder %v220, %v523
  %vm593 = vcmp.lt.f32.partialorder %v220, %v527
  %vm594 = vcmp.lt.f32.partialorder %v220, %v531
  %vm595 = vcmp.lt.f32.partialorder %v220, %v535
  %vm596 = vcmp.lt.f32.partialorder %v220, %v539
  %vm597 = vcmp.lt.f32.partialorder %v220, %v543
  %vm598 = vcmp.lt.f32.partialorder %v220, %v547
  %vm599 = vcmp.lt.f32.partialorder %v220, %v551
  %vm600 = vcmp.lt.f32.partialorder %v220, %v555
  %vm601 = vcmp.lt.f32.partialorder %v220, %v559
  %vm602 = vcmp.lt.f32.partialorder %v220, %v563
  %vm603 = vcmp.lt.f32.partialorder %v220, %v567
  %vm604 = vcmp.lt.f32.partialorder %v220, %v571
  %vm605 = vmand %vm413, %vm573
  %vm606 = vmand %vm414, %vm574
  %vm607 = vmand %vm415, %vm575
  %vm608 = vmand %vm416, %vm576
  %vm609 = vmand %vm417, %vm577
  %vm610 = vmand %vm418, %vm578
  %vm611 = vmand %vm419, %vm579
  %vm612 = vmand %vm420, %vm580
  %vm613 = vmand %vm421, %vm581
  %vm614 = vmand %vm422, %vm582
  %vm615 = vmand %vm423, %vm583
  %vm616 = vmand %vm424, %vm584
  %vm617 = vmand %vm425, %vm585
  %vm618 = vmand %vm426, %vm586
  %vm619 = vmand %vm427, %vm587
  %vm620 = vmand %vm428, %vm588
  %vm621 = vmand %vm429, %vm589
  %vm622 = vmand %vm430, %vm590
  %vm623 = vmand %vm431, %vm591
  %vm624 = vmand %vm432, %vm592
  %vm625 = vmand %vm433, %vm593
  %vm626 = vmand %vm434, %vm594
  %vm627 = vmand %vm435, %vm595
  %vm628 = vmand %vm436, %vm596
  %vm629 = vmand %vm437, %vm597
  %vm630 = vmand %vm438, %vm598
  %vm631 = vmand %vm439, %vm599
  %vm632 = vmand %vm440, %vm600
  %vm633 = vmand %vm441, %vm601
  %vm634 = vmand %vm442, %vm602
  %vm635 = vmand %vm443, %vm603
  %vm636 = vmand %vm444, %vm604
  %v637 = vsel %vm605, 1.0, 0.0
  %v638 = vsel %vm606, 1.0, 0.0
  %v639 = vsel %vm607, 1.0, 0.0
  %v640 = vsel %vm608, 1.0, 0.0
  %v641 = vsel %vm609, 1.0, 0.0
  %v642 = vsel %vm610, 1.0, 0.0
  %v643 = vsel %vm611, 1.0, 0.0
  %v644 = vsel %vm612, 1.0, 0.0
  %v645 = vsel %vm613, 1.0, 0.0
  %v646 = vsel %vm614, 1.0, 0.0
  %v647 = vsel %vm615, 1.0, 0.0
  %v648 = vsel %vm616, 1.0, 0.0
  %v649 = vsel %vm617, 1.0, 0.0
  %v650 = vsel %vm618, 1.0, 0.0
  %v651 = vsel %vm619, 1.0, 0.0
  %v652 = vsel %vm620, 1.0, 0.0
  %v653 = vsel %vm621, 1.0, 0.0
  %v654 = vsel %vm622, 1.0, 0.0
  %v655 = vsel %vm623, 1.0, 0.0
  %v656 = vsel %vm624, 1.0, 0.0
  %v657 = vsel %vm625, 1.0, 0.0
  %v658 = vsel %vm626, 1.0, 0.0
  %v659 = vsel %vm627, 1.0, 0.0
  %v660 = vsel %vm628, 1.0, 0.0
  %v661 = vsel %vm629, 1.0, 0.0
  %v662 = vsel %vm630, 1.0, 0.0
  %v663 = vsel %vm631, 1.0, 0.0
  %v664 = vsel %vm632, 1.0, 0.0
  %v665 = vsel %vm633, 1.0, 0.0
  %v666 = vsel %vm634, 1.0, 0.0
  %v667 = vsel %vm635, 1.0, 0.0
  %v668 = vsel %vm636, 1.0, 0.0
  %669 = vmatpush.msra.mxu0 %v652
  %670 = vmatpush.msra.mxu0 %v651
  %671 = vmatpush.msra.mxu0 %v650
  %672 = vmatpush.msra.mxu0 %v649
  %673 = vmatpush.msra.mxu0 %v648
  %674 = vmatpush.msra.mxu0 %v647
  %675 = vmatpush.msra.mxu0 %v646
  %676 = vmatpush.msra.mxu0 %v645
  %677 = vmatpush.msra.mxu0 %v644
  %678 = vmatpush.msra.mxu0 %v643
  %679 = vmatpush.msra.mxu0 %v642
  %680 = vmatpush.msra.mxu0 %v641
  %681 = vmatpush.msra.mxu0 %v640
  %682 = vmatpush.msra.mxu0 %v639
  %683 = vmatpush.msra.mxu0 %v638
  %684 = vmatpush.msra.mxu0 %v637
  %685 = vmatmul.f32.gmra.mxu0 %v207
  %v686 = vpop.f32.mrf.mxu0
  %v687 = vadd.f32 0.0, %v686
  %688 = vdwg.mxu0
  %689 = vmatpush.msra.mxu0 %v668
  %690 = vmatpush.msra.mxu0 %v667
  %691 = vmatpush.msra.mxu0 %v666
  %692 = vmatpush.msra.mxu0 %v665
  %693 = vmatpush.msra.mxu0 %v664
  %694 = vmatpush.msra.mxu0 %v663
  %695 = vmatpush.msra.mxu0 %v662
  %696 = vmatpush.msra.mxu0 %v661
  %697 = vmatpush.msra.mxu0 %v660
  %698 = vmatpush.msra.mxu0 %v659
  %699 = vmatpush.msra.mxu0 %v658
  %700 = vmatpush.msra.mxu0 %v657
  %701 = vmatpush.msra.mxu0 %v656
  %702 = vmatpush.msra.mxu0 %v655
  %703 = vmatpush.msra.mxu0 %v654
  %704 = vmatpush.msra.mxu0 %v653
  %705 = vmatmul.f32.gmra.mxu0 %v216
  %v706 = vpop.f32.mrf.mxu0
  %v707 = vadd.f32 %v687, %v706
  %708 = vdwg.mxu0
  %v710 = vrot.slane %v202, 6
  %v712 = vsub.f32 %v202, %v710
  %v713 = vrot.slane %v202, 7
  %v715 = vsub.f32 %v712, %v713
  %v716 = vsub.f32 %v11, %v13
  %v717 = vmul.f32 %v716, %v191
  %v719 = vrot.slane %v717, 6
  %v721 = vadd.f32 %v715, %v719
  %v722 = vsub.f32 %v12, %v14
  %v723 = vmul.f32 %v722, %v208
  %v725 = vrot.slane %v723, 6
  %v727 = vadd.f32 %v721, %v725
  %v728 = vadd.f32 %v13, %v14
  %v729 = vsub.f32 %v728, %v16
  %v730 = vmul.f32 %v729, %v204
  %v732 = vrot.slane %v730, 6
  %v734 = vadd.f32 %v727, %v732
  %v735 = vrot.slane %v15, 6
  %v737 = vmul.f32 %v734, %v735
  %vm738 = vcmask 1042434
  %v739 = vsel %vm738, %v737, 0.0
  %740 = vadd.xlane.f32.xlu0 %v739
  %v741 = vpop.xlane.xlu0 %740
  %v743 = vrot.slane %v741, 2
  %v745 = vrot.slane %v743, 7
  %vm746 = vcmask 1040384
  %v747 = vsel %vm746, %v707, %v745
  %v749 = vlaneseq
  %vm750 = vcmp.ge.s32.totalorder %v749, 0
  %vm751 = vcmp.lt.s32.totalorder %v749, 256
  %vm752 = vmand %vm750, %vm751
  %753 = vst.msk [vmem:[%s2] sm:$0x3] %vm752, %v747
  // Predicated region
  $region10: #{optional_polya_tree.1} parent=0 // pred_check
    _
  $region11: #{optional_polya_tree.1} parent=0 // pred_check_branch
    %755 = sbr.rel (0) target = $region13
  $region12: #{optional_polya_tree.1} parent=0 // pred_region
    _
  $region13: #{optional_polya_tree.1} parent=0 // pred_fallthru
    _
  // Predicated region
  $region14: #{optional_polya_tree.1} parent=0 // pred_check
    _
  $region15: #{optional_polya_tree.1} parent=0 // pred_check_branch
    %757 = sbr.rel (0) target = $region17
  $region16: #{optional_polya_tree.1} parent=0 // pred_region
    _
  $region17: #{optional_polya_tree.1} parent=0 // pred_fallthru
    _

</llo_original>
